<compile_context>
chip_gen: v7x
topology: tpu7x:2x2x1
jax: 0.10.0
libtpu: 0.0.40
codegen_flags: <defaults>
</compile_context>

<pallas_src>
import jax
import jax.numpy as jnp
from jax.experimental import pallas as pl
from jax.experimental.pallas import tpu as pltpu


def _round_up(x, m):
    return ((x + m - 1) // m) * m


def _codebook_argmin_kernel(z_ref, wt_ref, wsq_ref, idx_ref, minv_ref, mini_ref):
    # z_ref:   (TB, Dp)  bf16/f32  current batch tile
    # wt_ref:  (Dp, TK)  bf16/f32  pre-transposed codebook tile
    # wsq_ref: (1,  TK)  f32       0.5*||w_k||^2 for this tile (+inf on padded cols)
    # idx_ref: (TB, 1)   i32       output indices (written once, on last K step)
    # minv_ref/mini_ref: running (min score, argmin) accumulators (VMEM scratch)
    k = pl.program_id(1)
    nk = pl.num_programs(1)
    TK = wt_ref.shape[1]

    @pl.when(k == 0)
    def _init():
        minv_ref[...] = jnp.full_like(minv_ref, jnp.inf)
        mini_ref[...] = jnp.zeros_like(mini_ref)

    # scores[b, kk] = 0.5*||w_kk||^2 - z_b . w_kk   (MXU matmul, f32 accumulate;
    # contraction dims already aligned: z last dim x W^T first dim).
    zw = jax.lax.dot_general(z_ref[...], wt_ref[...], (((1,), (0,)), ((), ())),
                             preferred_element_type=jnp.float32)      # (TB, TK)
    scores = wsq_ref[...] - zw                                        # (TB, TK)

    # Per-tile min and first-occurrence local argmin.
    tile_min = jnp.min(scores, axis=-1, keepdims=True)                # (TB, 1)
    k_iota = jax.lax.broadcasted_iota(jnp.int32, scores.shape, 1)     # (TB, TK)
    local_idx = jnp.min(jnp.where(scores == tile_min, k_iota, TK),
                        axis=-1, keepdims=True)                       # (TB, 1)
    global_idx = local_idx + k * TK

    # Strict '<' preserves first-occurrence tie-break across K tiles.
    better = tile_min < minv_ref[...]
    mini_ref[...] = jnp.where(better, global_idx, mini_ref[...])
    minv_ref[...] = jnp.where(better, tile_min, minv_ref[...])

    @pl.when(k == nk - 1)
    def _store():
        idx_ref[...] = mini_ref[...]


def codebook_forward(z_e_x, weight, *, compute_dtype=jnp.bfloat16,
                     tb_max=512, tk_stream=1024, force_stream=False):
    """Pallas equivalent of CodeBook.forward: nearest-codebook indices, (B,) int32.

    compute_dtype: MXU operand dtype (f32 accumulate either way). bfloat16 halves
    HBM traffic and uses the bf16-native MXU path; near-ties within bf16 rounding
    may resolve differently than an f32 reference. Use jnp.float32 for exactness.
    """
    B, D = z_e_x.shape
    K, D2 = weight.shape
    assert D == D2

    # Cast BEFORE padding so the arrays handed to pallas_call already carry the
    # reduced-width HBM footprint.
    z = z_e_x.astype(compute_dtype)
    w = weight.astype(compute_dtype)
    # 0.5*||w||^2 (f32) of the codebook actually fed to the MXU; folding the 2x
    # scale here removes a full (TB,TK) VPU multiply from the kernel epilogue.
    wsq_half = 0.5 * jnp.sum(w.astype(jnp.float32) ** 2, axis=-1)     # (K,)

    # --- generation-aware VMEM budgets --------------------------------------
    try:
        vmem_cap = int(pltpu.get_tpu_info().vmem_capacity_bytes)
    except Exception:
        vmem_cap = 64 * 1024 * 1024            # conservative (v7x) fallback
    vmem_limit = min(int(vmem_cap * 0.8), 100 * 1024 * 1024)  # ~100MiB v5e/v6e, ~51MiB v7x
    budget = int(vmem_limit * 0.7)             # pipeline / compiler headroom
    bytes_e = jnp.dtype(compute_dtype).itemsize

    # --- tile sizing ----------------------------------------------------------
    D_pad = _round_up(D, 128)                  # contraction dim, kept whole
    TB = max(16, _round_up(min(B, tb_max), 16))  # 16: bf16 sublane packing

    def footprint(tb, tk, resident):
        z_b = tb * D_pad * bytes_e * 2                       # double-buffered
        w_b = D_pad * tk * bytes_e * (1 if resident else 2)
        wsq_b = tk * 4 * (1 if resident else 2)
        scr = tb * 4 * 2
        live = tb * tk * 4 * 3                               # scores + temps
        return z_b + w_b + wsq_b + scr + live

    K_res = _round_up(K, 256)                  # full MXU tiles (v6e/v7x 256x256)
    resident = (not force_stream) and footprint(TB, K_res, True) <= budget
    if resident:
        TK = K_res                             # whole codebook VMEM-resident
    else:
        TK = min(_round_up(max(tk_stream, 256), 256), _round_up(K, 256))
        while TK > 256 and footprint(TB, TK, False) > budget:
            TK = _round_up(TK // 2, 256)
        while TB > 16 and footprint(TB, TK, False) > budget:
            TB = max(16, _round_up(TB // 2, 16))
        # TODO(synk): very large D on v7x (64 MiB VMEM) would want a D-tiled variant
        # (zw accumulator in scratch, argmin on the last D step).
    B_pad = _round_up(B, TB)
    K_pad = _round_up(K, TK)

    # --- padding (padded codebook columns get +inf half-norm -> never win) ---
    z_p = jnp.zeros((B_pad, D_pad), compute_dtype).at[:B, :D].set(z)
    wt_p = jnp.zeros((D_pad, K_pad), compute_dtype).at[:D, :K].set(w.T)
    wsq_p = jnp.full((1, K_pad), jnp.inf, jnp.float32).at[0, :K].set(wsq_half)

    grid = (B_pad // TB, K_pad // TK)

    def _call(single_buffer_w):
        if single_buffer_w:
            # Resident codebook: block index never changes -> one buffer suffices,
            # halving the codebook's VMEM footprint.
            w_spec = pl.BlockSpec((D_pad, TK), lambda b, k: (0, k),
                                  pipeline_mode=pl.Buffered(1))
            wsq_spec = pl.BlockSpec((1, TK), lambda b, k: (0, k),
                                    pipeline_mode=pl.Buffered(1))
        else:
            w_spec = pl.BlockSpec((D_pad, TK), lambda b, k: (0, k))
            wsq_spec = pl.BlockSpec((1, TK), lambda b, k: (0, k))
        out = pl.pallas_call(
            _codebook_argmin_kernel,
            out_shape=jax.ShapeDtypeStruct((B_pad, 1), jnp.int32),
            grid_spec=pltpu.PrefetchScalarGridSpec(
                num_scalar_prefetch=0,
                grid=grid,
                in_specs=[
                    pl.BlockSpec((TB, D_pad), lambda b, k: (b, 0)),   # z tile
                    w_spec,                                           # W^T tile
                    wsq_spec,                                         # 0.5*||w||^2
                ],
                out_specs=pl.BlockSpec((TB, 1), lambda b, k: (b, 0)),
                scratch_shapes=[
                    pltpu.VMEM((TB, 1), jnp.float32),   # running min score
                    pltpu.VMEM((TB, 1), jnp.int32),     # running argmin
                ],
            ),
            compiler_params=pltpu.CompilerParams(
                dimension_semantics=("parallel", "arbitrary"),
                vmem_limit_bytes=vmem_limit,
            ),
        )(z_p, wt_p, wsq_p)
        return jax.block_until_ready(out)

    if resident:
        try:
            idx_padded = _call(True)
        except Exception:
            # TODO(synk): some jax versions reject pl.Buffered(1); fall back to the
            # default double-buffered resident codebook.
            idx_padded = _call(False)
    else:
        idx_padded = _call(False)

    return idx_padded[:B, 0]


def make_codebook_weight(key, K, D, init="uniform"):
    """Deterministic parameter init matching CodeBook.initialize_embeddings."""
    if init == "uniform":
        return jax.random.uniform(key, (K, D), dtype=jnp.float32,
                                  minval=-1.0 / K, maxval=1.0 / K)
    elif init == "normal":
        return jax.random.normal(key, (K, D), dtype=jnp.float32)
    else:
        # TODO(synk): xavier/kaiming/orthogonal/sparse/eye torch init schemes not replicated.
        raise ValueError("Unknown init method")


def _reference_forward(z_e_x, weight):
    # Pure-JAX reference mirroring the exact PyTorch code path (for validation).
    d = jnp.sum((z_e_x[:, None, :] - weight[None, :, :]) ** 2, axis=-1)
    return jnp.argmin(d, axis=-1).astype(jnp.int32)


def _check_near_optimal(z_e_x, weight, idx, tol=0.05):
    # Tolerance-based check (review note): the selected codeword's true squared
    # distance must be within tol of the true minimum (robust to bf16 near-ties).
    d = jnp.sum((z_e_x[:, None, :] - weight[None, :, :]) ** 2, axis=-1)
    d_sel = jnp.take_along_axis(d, idx[:, None].astype(jnp.int32), axis=1)[:, 0]
    d_min = jnp.min(d, axis=-1)
    assert bool(jnp.all(d_sel <= d_min + tol * (1.0 + jnp.abs(d_min)))), \
        "kernel picked a codeword that is not (near-)nearest"


if __name__ == "__main__":
    key = jax.random.PRNGKey(0)
    k1, k2, k3, k4 = jax.random.split(key, 4)

    # Case 1: small shapes consistent with the module (batch=8, K=16, D=32).
    # Default bf16 MXU path, whole codebook VMEM-resident (single-buffered).
    B, K, D = 8, 16, 32
    z1 = jax.random.normal(k1, (B, D), dtype=jnp.float32)
    w1 = make_codebook_weight(k2, K, D, init="uniform")
    idx1 = codebook_forward(z1, w1)
    jax.block_until_ready(idx1)
    assert idx1.shape == (B,) and idx1.dtype == jnp.int32
    _check_near_optimal(z1, w1, idx1)

    # Case 2: exercise the streamed multi-tile path (padding, K-tile argmin carry,
    # parallel B axis) with f32 operands -> exact argmin match with the reference.
    B2, K2, D2 = 272, 300, 40
    z2 = jax.random.normal(k3, (B2, D2), dtype=jnp.float32)
    w2 = make_codebook_weight(k4, K2, D2, init="normal")
    idx2 = codebook_forward(z2, w2, compute_dtype=jnp.float32,
                            tb_max=128, tk_stream=256, force_stream=True)
    jax.block_until_ready(idx2)
    assert idx2.shape == (B2,)
    assert bool(jnp.all(idx2 == _reference_forward(z2, w2)))
    _check_near_optimal(z2, w2, idx2)

    print("KERNEL_OK")
</pallas_src>

<mosaic_0001>
module attributes {stable_mosaic.version = 11 : i64} {
  func.func @_codebook_argmin_kernel(%arg0: i32, %arg1: i32, %arg2: memref<16x128xbf16, #tpu.memory_space<vmem>>, %arg3: memref<128x256xbf16, #tpu.memory_space<vmem>>, %arg4: memref<1x256xf32, #tpu.memory_space<vmem>>, %arg5: memref<16x1xi32, #tpu.memory_space<vmem>>, %arg6: memref<16x1xf32, #tpu.memory_space<vmem>>, %arg7: memref<16x1xi32, #tpu.memory_space<vmem>>) attributes {dimension_semantics = [#tpu.dimension_semantics<parallel>, #tpu.dimension_semantics<arbitrary>], iteration_bounds = array<i64: 1, 1>, scalar_prefetch = 0 : i64, scratch_operands = 2 : i64, tpu.core_type = #tpu.core_type<tc>, window_params = [{transform_indices = @transform_0, window_bounds = array<i64: 16, 128>}, {pipeline_mode = #tpu.pipeline_mode<synchronous>, transform_indices = @transform_1, window_bounds = array<i64: 128, 256>}, {pipeline_mode = #tpu.pipeline_mode<synchronous>, transform_indices = @transform_2, window_bounds = array<i64: 1, 256>}, {transform_indices = @transform_3, window_bounds = array<i64: 16, 1>}]} {
    %c0_i32 = arith.constant 0 : i32
    %0 = arith.cmpi eq, %arg1, %c0_i32 : i32
    %1 = arith.extui %0 : i1 to i32
    %c0_i32_0 = arith.constant 0 : i32
    %2 = arith.cmpi ne, %1, %c0_i32_0 : i32
    scf.if %2 {
      %cst_21 = arith.constant 0x7F800000 : f32
      %32 = vector.broadcast %cst_21 : f32 to vector<16x1xf32>
      %c0_22 = arith.constant 0 : index
      %c0_23 = arith.constant 0 : index
      %33 = vector.load %arg6[%c0_22, %c0_23] : memref<16x1xf32, #tpu.memory_space<vmem>>, vector<16x1xf32>
      tpu.vector_store %arg6[%c0_22, %c0_23], %32 {strides = array<i32>} : memref<16x1xf32, #tpu.memory_space<vmem>>, vector<16x1xf32>,
      %c0_i32_24 = arith.constant 0 : i32
      %34 = vector.broadcast %c0_i32_24 : i32 to vector<16x1xi32>
      %c0_25 = arith.constant 0 : index
      %c0_26 = arith.constant 0 : index
      %35 = vector.load %arg7[%c0_25, %c0_26] : memref<16x1xi32, #tpu.memory_space<vmem>>, vector<16x1xi32>
      tpu.vector_store %arg7[%c0_25, %c0_26], %34 {strides = array<i32>} : memref<16x1xi32, #tpu.memory_space<vmem>>, vector<16x1xi32>,
    } else {
    }
    %c0 = arith.constant 0 : index
    %c0_1 = arith.constant 0 : index
    %3 = vector.load %arg2[%c0, %c0_1] : memref<16x128xbf16, #tpu.memory_space<vmem>>, vector<16x128xbf16>
    %c0_2 = arith.constant 0 : index
    %c0_3 = arith.constant 0 : index
    %4 = vector.load %arg3[%c0_2, %c0_3] : memref<128x256xbf16, #tpu.memory_space<vmem>>, vector<128x256xbf16>
    %cst = arith.constant dense<0.000000e+00> : vector<16x256xf32>
    %5 = tpu.matmul %3, %4, %cst {dimension_numbers = #tpu.dot_dimension_numbers<[1], [0], [0], [1], [0, 0, 1, 1], [], []>} : vector<16x128xbf16>, vector<128x256xbf16>, vector<16x256xf32> -> vector<16x256xf32>
    %c0_4 = arith.constant 0 : index
    %c0_5 = arith.constant 0 : index
    %6 = vector.load %arg4[%c0_4, %c0_5] : memref<1x256xf32, #tpu.memory_space<vmem>>, vector<1x256xf32>
    %7 = vector.broadcast %6 : vector<1x256xf32> to vector<16x256xf32>
    %8 = arith.subf %7, %5 : vector<16x256xf32>
    %cst_6 = arith.constant dense<0x7F800000> : vector<16xf32>
    %9 = vector.multi_reduction <minimumf>, %8, %cst_6 [1] : vector<16x256xf32> to vector<16xf32>
    %10 = vector.shape_cast %9 : vector<16xf32> to vector<16x1xf32>
    %11 = tpu.iota {dimensions = array<i32: 1>} : vector<16x256xi32>
    %12 = vector.broadcast %10 : vector<16x1xf32> to vector<16x256xf32>
    %13 = arith.cmpf oeq, %8, %12 : vector<16x256xf32>
    %c256_i32 = arith.constant 256 : i32
    %14 = vector.broadcast %c256_i32 : i32 to vector<16x256xi32>
    %15 = arith.select %13, %11, %14 : vector<16x256xi1>, vector<16x256xi32>
    %cst_7 = arith.constant dense<2147483647> : vector<16xi32>
    %16 = vector.multi_reduction <minsi>, %15, %cst_7 [1] : vector<16x256xi32> to vector<16xi32>
    %17 = vector.shape_cast %16 : vector<16xi32> to vector<16x1xi32>
    %c256_i32_8 = arith.constant 256 : i32
    %18 = arith.muli %arg1, %c256_i32_8 : i32
    %19 = vector.broadcast %18 : i32 to vector<16x1xi32>
    %20 = arith.addi %17, %19 : vector<16x1xi32>
    %c0_9 = arith.constant 0 : index
    %c0_10 = arith.constant 0 : index
    %21 = vector.load %arg6[%c0_9, %c0_10] : memref<16x1xf32, #tpu.memory_space<vmem>>, vector<16x1xf32>
    %22 = arith.cmpf olt, %10, %21 : vector<16x1xf32>
    %c0_11 = arith.constant 0 : index
    %c0_12 = arith.constant 0 : index
    %23 = vector.load %arg7[%c0_11, %c0_12] : memref<16x1xi32, #tpu.memory_space<vmem>>, vector<16x1xi32>
    %24 = arith.select %22, %20, %23 : vector<16x1xi1>, vector<16x1xi32>
    %c0_13 = arith.constant 0 : index
    %c0_14 = arith.constant 0 : index
    %25 = vector.load %arg7[%c0_13, %c0_14] : memref<16x1xi32, #tpu.memory_space<vmem>>, vector<16x1xi32>
    tpu.vector_store %arg7[%c0_13, %c0_14], %24 {strides = array<i32>} : memref<16x1xi32, #tpu.memory_space<vmem>>, vector<16x1xi32>,
    %c0_15 = arith.constant 0 : index
    %c0_16 = arith.constant 0 : index
    %26 = vector.load %arg6[%c0_15, %c0_16] : memref<16x1xf32, #tpu.memory_space<vmem>>, vector<16x1xf32>
    %27 = arith.select %22, %10, %26 : vector<16x1xi1>, vector<16x1xf32>
    %c0_17 = arith.constant 0 : index
    %c0_18 = arith.constant 0 : index
    %28 = vector.load %arg6[%c0_17, %c0_18] : memref<16x1xf32, #tpu.memory_space<vmem>>, vector<16x1xf32>
    tpu.vector_store %arg6[%c0_17, %c0_18], %27 {strides = array<i32>} : memref<16x1xf32, #tpu.memory_space<vmem>>, vector<16x1xf32>,
    %c0_i32_19 = arith.constant 0 : i32
    %29 = arith.cmpi eq, %arg1, %c0_i32_19 : i32
    %30 = arith.extui %29 : i1 to i32
    %c0_i32_20 = arith.constant 0 : i32
    %31 = arith.cmpi ne, %30, %c0_i32_20 : i32
    scf.if %31 {
      %c0_21 = arith.constant 0 : index
      %c0_22 = arith.constant 0 : index
      %32 = vector.load %arg7[%c0_21, %c0_22] : memref<16x1xi32, #tpu.memory_space<vmem>>, vector<16x1xi32>
      %c0_23 = arith.constant 0 : index
      %c0_24 = arith.constant 0 : index
      %33 = vector.load %arg5[%c0_23, %c0_24] : memref<16x1xi32, #tpu.memory_space<vmem>>, vector<16x1xi32>
      tpu.vector_store %arg5[%c0_23, %c0_24], %32 {strides = array<i32>} : memref<16x1xi32, #tpu.memory_space<vmem>>, vector<16x1xi32>,
    } else {
    }
    return
  }
  func.func @transform_0(%arg0: i32, %arg1: i32) -> (i32, i32) {
    %c0_i32 = arith.constant 0 : i32
    %c0_i32_0 = arith.constant 0 : i32
    return %arg0, %c0_i32 : i32, i32
  }
  func.func @transform_1(%arg0: i32, %arg1: i32) -> (i32, i32) {
    %c0_i32 = arith.constant 0 : i32
    %c0_i32_0 = arith.constant 0 : i32
    return %c0_i32, %arg1 : i32, i32
  }
  func.func @transform_2(%arg0: i32, %arg1: i32) -> (i32, i32) {
    %c0_i32 = arith.constant 0 : i32
    %c0_i32_0 = arith.constant 0 : i32
    return %c0_i32, %arg1 : i32, i32
  }
  func.func @transform_3(%arg0: i32, %arg1: i32) -> (i32, i32) {
    %c0_i32 = arith.constant 0 : i32
    %c0_i32_0 = arith.constant 0 : i32
    return %arg0, %c0_i32 : i32, i32
  }
}

module attributes {stable_mosaic.version = 11 : i64} {
  func.func @_codebook_argmin_kernel(%arg0: i32, %arg1: i32, %arg2: memref<16x128xbf16, #tpu.memory_space<vmem>>, %arg3: memref<128x256xbf16, #tpu.memory_space<vmem>>, %arg4: memref<1x256xf32, #tpu.memory_space<vmem>>, %arg5: memref<16x1xi32, #tpu.memory_space<vmem>>, %arg6: memref<16x1xf32, #tpu.memory_space<vmem>>, %arg7: memref<16x1xi32, #tpu.memory_space<vmem>>) attributes {dimension_semantics = [#tpu.dimension_semantics<parallel>, #tpu.dimension_semantics<arbitrary>], iteration_bounds = array<i64: 1, 1>, scalar_prefetch = 0 : i64, scratch_operands = 2 : i64, tpu.core_type = #tpu.core_type<tc>, window_params = [{transform_indices = @transform_0, window_bounds = array<i64: 16, 128>}, {transform_indices = @transform_1, window_bounds = array<i64: 128, 256>}, {transform_indices = @transform_2, window_bounds = array<i64: 1, 256>}, {transform_indices = @transform_3, window_bounds = array<i64: 16, 1>}]} {
    %c0_i32 = arith.constant 0 : i32
    %0 = arith.cmpi eq, %arg1, %c0_i32 : i32
    %1 = arith.extui %0 : i1 to i32
    %c0_i32_0 = arith.constant 0 : i32
    %2 = arith.cmpi ne, %1, %c0_i32_0 : i32
    scf.if %2 {
      %cst_21 = arith.constant 0x7F800000 : f32
      %32 = vector.broadcast %cst_21 : f32 to vector<16x1xf32>
      %c0_22 = arith.constant 0 : index
      %c0_23 = arith.constant 0 : index
      %33 = vector.load %arg6[%c0_22, %c0_23] : memref<16x1xf32, #tpu.memory_space<vmem>>, vector<16x1xf32>
      tpu.vector_store %arg6[%c0_22, %c0_23], %32 {strides = array<i32>} : memref<16x1xf32, #tpu.memory_space<vmem>>, vector<16x1xf32>,
      %c0_i32_24 = arith.constant 0 : i32
      %34 = vector.broadcast %c0_i32_24 : i32 to vector<16x1xi32>
      %c0_25 = arith.constant 0 : index
      %c0_26 = arith.constant 0 : index
      %35 = vector.load %arg7[%c0_25, %c0_26] : memref<16x1xi32, #tpu.memory_space<vmem>>, vector<16x1xi32>
      tpu.vector_store %arg7[%c0_25, %c0_26], %34 {strides = array<i32>} : memref<16x1xi32, #tpu.memory_space<vmem>>, vector<16x1xi32>,
    } else {
    }
    %c0 = arith.constant 0 : index
    %c0_1 = arith.constant 0 : index
    %3 = vector.load %arg2[%c0, %c0_1] : memref<16x128xbf16, #tpu.memory_space<vmem>>, vector<16x128xbf16>
    %c0_2 = arith.constant 0 : index
    %c0_3 = arith.constant 0 : index
    %4 = vector.load %arg3[%c0_2, %c0_3] : memref<128x256xbf16, #tpu.memory_space<vmem>>, vector<128x256xbf16>
    %cst = arith.constant dense<0.000000e+00> : vector<16x256xf32>
    %5 = tpu.matmul %3, %4, %cst {dimension_numbers = #tpu.dot_dimension_numbers<[1], [0], [0], [1], [0, 0, 1, 1], [], []>} : vector<16x128xbf16>, vector<128x256xbf16>, vector<16x256xf32> -> vector<16x256xf32>
    %c0_4 = arith.constant 0 : index
    %c0_5 = arith.constant 0 : index
    %6 = vector.load %arg4[%c0_4, %c0_5] : memref<1x256xf32, #tpu.memory_space<vmem>>, vector<1x256xf32>
    %7 = vector.broadcast %6 : vector<1x256xf32> to vector<16x256xf32>
    %8 = arith.subf %7, %5 : vector<16x256xf32>
    %cst_6 = arith.constant dense<0x7F800000> : vector<16xf32>
    %9 = vector.multi_reduction <minimumf>, %8, %cst_6 [1] : vector<16x256xf32> to vector<16xf32>
    %10 = vector.shape_cast %9 : vector<16xf32> to vector<16x1xf32>
    %11 = tpu.iota {dimensions = array<i32: 1>} : vector<16x256xi32>
    %12 = vector.broadcast %10 : vector<16x1xf32> to vector<16x256xf32>
    %13 = arith.cmpf oeq, %8, %12 : vector<16x256xf32>
    %c256_i32 = arith.constant 256 : i32
    %14 = vector.broadcast %c256_i32 : i32 to vector<16x256xi32>
    %15 = arith.select %13, %11, %14 : vector<16x256xi1>, vector<16x256xi32>
    %cst_7 = arith.constant dense<2147483647> : vector<16xi32>
    %16 = vector.multi_reduction <minsi>, %15, %cst_7 [1] : vector<16x256xi32> to vector<16xi32>
    %17 = vector.shape_cast %16 : vector<16xi32> to vector<16x1xi32>
    %c256_i32_8 = arith.constant 256 : i32
    %18 = arith.muli %arg1, %c256_i32_8 : i32
    %19 = vector.broadcast %18 : i32 to vector<16x1xi32>
    %20 = arith.addi %17, %19 : vector<16x1xi32>
    %c0_9 = arith.constant 0 : index
    %c0_10 = arith.constant 0 : index
    %21 = vector.load %arg6[%c0_9, %c0_10] : memref<16x1xf32, #tpu.memory_space<vmem>>, vector<16x1xf32>
    %22 = arith.cmpf olt, %10, %21 : vector<16x1xf32>
    %c0_11 = arith.constant 0 : index
    %c0_12 = arith.constant 0 : index
    %23 = vector.load %arg7[%c0_11, %c0_12] : memref<16x1xi32, #tpu.memory_space<vmem>>, vector<16x1xi32>
    %24 = arith.select %22, %20, %23 : vector<16x1xi1>, vector<16x1xi32>
    %c0_13 = arith.constant 0 : index
    %c0_14 = arith.constant 0 : index
    %25 = vector.load %arg7[%c0_13, %c0_14] : memref<16x1xi32, #tpu.memory_space<vmem>>, vector<16x1xi32>
    tpu.vector_store %arg7[%c0_13, %c0_14], %24 {strides = array<i32>} : memref<16x1xi32, #tpu.memory_space<vmem>>, vector<16x1xi32>,
    %c0_15 = arith.constant 0 : index
    %c0_16 = arith.constant 0 : index
    %26 = vector.load %arg6[%c0_15, %c0_16] : memref<16x1xf32, #tpu.memory_space<vmem>>, vector<16x1xf32>
    %27 = arith.select %22, %10, %26 : vector<16x1xi1>, vector<16x1xf32>
    %c0_17 = arith.constant 0 : index
    %c0_18 = arith.constant 0 : index
    %28 = vector.load %arg6[%c0_17, %c0_18] : memref<16x1xf32, #tpu.memory_space<vmem>>, vector<16x1xf32>
    tpu.vector_store %arg6[%c0_17, %c0_18], %27 {strides = array<i32>} : memref<16x1xf32, #tpu.memory_space<vmem>>, vector<16x1xf32>,
    %c0_i32_19 = arith.constant 0 : i32
    %29 = arith.cmpi eq, %arg1, %c0_i32_19 : i32
    %30 = arith.extui %29 : i1 to i32
    %c0_i32_20 = arith.constant 0 : i32
    %31 = arith.cmpi ne, %30, %c0_i32_20 : i32
    scf.if %31 {
      %c0_21 = arith.constant 0 : index
      %c0_22 = arith.constant 0 : index
      %32 = vector.load %arg7[%c0_21, %c0_22] : memref<16x1xi32, #tpu.memory_space<vmem>>, vector<16x1xi32>
      %c0_23 = arith.constant 0 : index
      %c0_24 = arith.constant 0 : index
      %33 = vector.load %arg5[%c0_23, %c0_24] : memref<16x1xi32, #tpu.memory_space<vmem>>, vector<16x1xi32>
      tpu.vector_store %arg5[%c0_23, %c0_24], %32 {strides = array<i32>} : memref<16x1xi32, #tpu.memory_space<vmem>>, vector<16x1xi32>,
    } else {
    }
    return
  }
  func.func @transform_0(%arg0: i32, %arg1: i32) -> (i32, i32) {
    %c0_i32 = arith.constant 0 : i32
    %c0_i32_0 = arith.constant 0 : i32
    return %arg0, %c0_i32 : i32, i32
  }
  func.func @transform_1(%arg0: i32, %arg1: i32) -> (i32, i32) {
    %c0_i32 = arith.constant 0 : i32
    %c0_i32_0 = arith.constant 0 : i32
    return %c0_i32, %arg1 : i32, i32
  }
  func.func @transform_2(%arg0: i32, %arg1: i32) -> (i32, i32) {
    %c0_i32 = arith.constant 0 : i32
    %c0_i32_0 = arith.constant 0 : i32
    return %c0_i32, %arg1 : i32, i32
  }
  func.func @transform_3(%arg0: i32, %arg1: i32) -> (i32, i32) {
    %c0_i32 = arith.constant 0 : i32
    %c0_i32_0 = arith.constant 0 : i32
    return %arg0, %c0_i32 : i32, i32
  }
}

</mosaic_0001>

<llo_original>
// kernel: tpu_custom_call.1
$region0: #{tpu_custom_call.1}
  #allocation0 [shape = 'u32[]', space=smem, size = 0x4, offset = 0x4, fixed_abs, tag = 'smem constant byte address 0x4 - core index']
  #allocation1 [shape = 'u32[144,128]{1,0:T(1,128)}', space=vmem, size = 0x12000, scoped, tag = 'internal scratch']
  #allocation2 [shape = 'f32[16,1]{1,0:T(8,128)}', space=vmem, size = 0x2000, scoped, tag = 'scratch operand']
  #allocation3 [shape = 's32[16,1]{1,0:T(8,128)}', space=vmem, size = 0x2000, scoped, tag = 'scratch operand']
  %s0 = inlined_call_operand.hbm [shape: bf16[16,128], index: 0, kind: input, shape index: {}]
  %s1 = inlined_call_operand.hbm [shape: bf16[128,256], index: 1, kind: input, shape index: {}]
  %s2 = inlined_call_operand.vmem [shape: f32[1,256], index: 2, kind: input, shape index: {}]
  %s3 = inlined_call_operand.vmem [shape: s32[16,1], index: 3, kind: output, shape index: {}]
  %s4 = sld [smem:[#allocation0]]
  $region38: #{tpu_custom_call.1} parent=0
    _
  %s6 = ssub.s32 1, %s4
  %s7 = scalar_select 0, %s6, %s4
  $region1: #{tpu_custom_call.1} parent=0
    #allocation4 [shape = 'u8[4096]{0}', space=vmem, size = 0x1000, scoped, tag = 'input window, operand 0, single buffered']
    #allocation5 [shape = 's32[1]{0}', space=sflag, size = 0x4, scoped, tag = 'scoped memory for tpu_custom_call.1']
    #allocation6 [shape = 'u8[65536]{0}', space=vmem, size = 0x10000, scoped, tag = 'input window, operand 1, single buffered']
    #allocation7 [shape = 's32[1]{0}', space=sflag, size = 0x4, scoped, tag = 'scoped memory for tpu_custom_call.1']
    %8 = vsyncpa [#allocation5], 0
    %9 = vsyncpa [#allocation7], 0
    // Predicated region
    $region2: #{tpu_custom_call.1} parent=1 // pred_check
      _
    $region3: #{tpu_custom_call.1} parent=1 // pred_check_branch
      %11 = sbr.rel (0) target = $region5
    $region4: #{tpu_custom_call.1} parent=1 // pred_region
      %s13 = ssub.s32 128, 128
      %14 = vsyncadd [#allocation5], %s13
      %s15 = sshll.u32 [#allocation4], 4
      %s16 = int_to_ptr.vmem [resolvable:$true] %s15
      %21 = dma.hbm_to_vmem [thread:$0]  %s0, 128, %s16, [#allocation5], 64, 64, 4
    $region5: #{tpu_custom_call.1} parent=1 // pred_fallthru
      _
    // Predicated region
    $region6: #{tpu_custom_call.1} parent=1 // pred_check
      _
    $region7: #{tpu_custom_call.1} parent=1 // pred_check_branch
      %23 = sbr.rel (0) target = $region9
    $region8: #{tpu_custom_call.1} parent=1 // pred_region
      %s25 = ssub.s32 2048, 2048
      %26 = vsyncadd [#allocation7], %s25
      %s27 = sshll.u32 [#allocation6], 4
      %s28 = int_to_ptr.vmem [resolvable:$true] %s27
      %33 = dma.hbm_to_vmem [thread:$0]  %s1, 2048, %s28, [#allocation7], 128, 128, 8
    $region9: #{tpu_custom_call.1} parent=1 // pred_fallthru
      _
    // Predicated region
    $region10: #{tpu_custom_call.1} parent=1 // pred_check
      _
    $region11: #{tpu_custom_call.1} parent=1 // pred_check_branch
      %35 = sbr.rel (0) target = $region13
    $region12: #{tpu_custom_call.1} parent=1 // pred_region
      _
    $region13: #{tpu_custom_call.1} parent=1 // pred_fallthru
      _
    // Predicated region
    $region14: #{tpu_custom_call.1} parent=1 // pred_check
      _
    $region15: #{tpu_custom_call.1} parent=1 // pred_check_branch
      %37 = sbr.rel (0) target = $region17
    $region16: #{tpu_custom_call.1} parent=1 // pred_region
      %38 = dma.done [#allocation5], 128
    $region17: #{tpu_custom_call.1} parent=1 // pred_fallthru
      _
    // Predicated region
    $region18: #{tpu_custom_call.1} parent=1 // pred_check
      _
    $region19: #{tpu_custom_call.1} parent=1 // pred_check_branch
      %40 = sbr.rel (0) target = $region21
    $region20: #{tpu_custom_call.1} parent=1 // pred_region
      %41 = dma.done [#allocation7], 2048
    $region21: #{tpu_custom_call.1} parent=1 // pred_fallthru
      _
    %p43 = scmp.eq.s32.totalorder 0, 0
    // Predicated region
    $region22: #{tpu_custom_call.1} parent=1 // pred_check
      %p44 = pneg %p43
    $region23: #{tpu_custom_call.1} parent=1 // pred_check_branch
      %46 = sbr.rel (%p44) target = $region25
    $region24: #{tpu_custom_call.1} parent=1 // pred_region
      %vm47 = vcmask 7168
      %48 = vst.msk [vmem:[#allocation2] sm:$0xff] %vm47, inf
      %49 = vst.msk [vmem:[#allocation2 + $0x8] sm:$0xff] %vm47, inf
      %50 = vst.msk [vmem:[#allocation3] sm:$0xff] %vm47, 0
      %51 = vst.msk [vmem:[#allocation3 + $0x8] sm:$0xff] %vm47, 0
    $region25: #{tpu_custom_call.1} parent=1 // pred_fallthru
      _
    %v52 = vld [vmem:[#allocation4] sm:$0xf]
    %v53 = vld [vmem:[#allocation4 + $0x4] sm:$0xf]
    %v54 = vld [vmem:[#allocation6] sm:$0xff]
    %v55 = vld [vmem:[#allocation6 + $0x8] sm:$0xff]
    %v56 = vld [vmem:[#allocation6 + $0x10] sm:$0xff]
    %v57 = vld [vmem:[#allocation6 + $0x18] sm:$0xff]
    %v58 = vld [vmem:[#allocation6 + $0x20] sm:$0xff]
    %v59 = vld [vmem:[#allocation6 + $0x28] sm:$0xff]
    %v60 = vld [vmem:[#allocation6 + $0x30] sm:$0xff]
    %v61 = vld [vmem:[#allocation6 + $0x38] sm:$0xff]
    %v62 = vld [vmem:[#allocation6 + $0x40] sm:$0xff]
    %v63 = vld [vmem:[#allocation6 + $0x48] sm:$0xff]
    %v64 = vld [vmem:[#allocation6 + $0x50] sm:$0xff]
    %v65 = vld [vmem:[#allocation6 + $0x58] sm:$0xff]
    %v66 = vld [vmem:[#allocation6 + $0x60] sm:$0xff]
    %v67 = vld [vmem:[#allocation6 + $0x68] sm:$0xff]
    %v68 = vld [vmem:[#allocation6 + $0x70] sm:$0xff]
    %v69 = vld [vmem:[#allocation6 + $0x78] sm:$0xff]
    %v72 = vunpack.c.l.b16 %v52
    %v73 = vunpack.c.l.b16 %v53
    %v74 = vpack.c.b16 %v73, %v72
    %v92 = vunpack.c.l.b16 %v54
    %v93 = vunpack.c.h.b16 %v54
    %v94 = vunpack.c.l.b16 %v55
    %v95 = vunpack.c.h.b16 %v55
    %v96 = vunpack.c.l.b16 %v56
    %v97 = vunpack.c.h.b16 %v56
    %v98 = vunpack.c.l.b16 %v57
    %v99 = vunpack.c.h.b16 %v57
    %v100 = vunpack.c.l.b16 %v58
    %v101 = vunpack.c.h.b16 %v58
    %v102 = vunpack.c.l.b16 %v59
    %v103 = vunpack.c.h.b16 %v59
    %v104 = vunpack.c.l.b16 %v60
    %v105 = vunpack.c.h.b16 %v60
    %v106 = vunpack.c.l.b16 %v61
    %v107 = vunpack.c.h.b16 %v61
    %v108 = vunpack.c.l.b16 %v62
    %v109 = vunpack.c.h.b16 %v62
    %v110 = vunpack.c.l.b16 %v63
    %v111 = vunpack.c.h.b16 %v63
    %v112 = vunpack.c.l.b16 %v64
    %v113 = vunpack.c.h.b16 %v64
    %v114 = vunpack.c.l.b16 %v65
    %v115 = vunpack.c.h.b16 %v65
    %v116 = vunpack.c.l.b16 %v66
    %v117 = vunpack.c.h.b16 %v66
    %v118 = vunpack.c.l.b16 %v67
    %v119 = vunpack.c.h.b16 %v67
    %v120 = vunpack.c.l.b16 %v68
    %v121 = vunpack.c.h.b16 %v68
    %v122 = vunpack.c.l.b16 %v69
    %v123 = vunpack.c.h.b16 %v69
    %v124 = vpack.c.b16 %v94, %v92
    %v125 = vpack.c.b16 %v95, %v93
    %v126 = vpack.c.b16 %v98, %v96
    %v127 = vpack.c.b16 %v99, %v97
    %v128 = vpack.c.b16 %v102, %v100
    %v129 = vpack.c.b16 %v103, %v101
    %v130 = vpack.c.b16 %v106, %v104
    %v131 = vpack.c.b16 %v107, %v105
    %v132 = vpack.c.b16 %v110, %v108
    %v133 = vpack.c.b16 %v111, %v109
    %v134 = vpack.c.b16 %v114, %v112
    %v135 = vpack.c.b16 %v115, %v113
    %v136 = vpack.c.b16 %v118, %v116
    %v137 = vpack.c.b16 %v119, %v117
    %v138 = vpack.c.b16 %v122, %v120
    %v139 = vpack.c.b16 %v123, %v121
    %156 = vmatprep.subr.bf16.mxu0 %v125
    %157 = vmatpush1.bf16.msra.mxu0 %v124
    %158 = vmatprep.subr.bf16.mxu0 %v127
    %159 = vmatpush1.bf16.msra.mxu0 %v126
    %160 = vmatprep.subr.bf16.mxu0 %v129
    %161 = vmatpush1.bf16.msra.mxu0 %v128
    %162 = vmatprep.subr.bf16.mxu0 %v131
    %163 = vmatpush1.bf16.msra.mxu0 %v130
    %164 = vmatprep.subr.bf16.mxu0 %v133
    %165 = vmatpush1.bf16.msra.mxu0 %v132
    %166 = vmatprep.subr.bf16.mxu0 %v135
    %167 = vmatpush1.bf16.msra.mxu0 %v134
    %168 = vmatprep.subr.bf16.mxu0 %v137
    %169 = vmatpush1.bf16.msra.mxu0 %v136
    %170 = vmatprep.subr.bf16.mxu0 %v139
    %171 = vmatpush1.bf16.msra.mxu0 %v138
    %172 = vmatprep.subr.bf16.mxu0 0
    %173 = vmatpush1.bf16.msra.mxu0 0
    %174 = vmatprep.subr.bf16.mxu0 0
    %175 = vmatpush1.bf16.msra.mxu0 0
    %176 = vmatprep.subr.bf16.mxu0 0
    %177 = vmatpush1.bf16.msra.mxu0 0
    %178 = vmatprep.subr.bf16.mxu0 0
    %179 = vmatpush1.bf16.msra.mxu0 0
    %180 = vmatprep.subr.bf16.mxu0 0
    %181 = vmatpush1.bf16.msra.mxu0 0
    %182 = vmatprep.subr.bf16.mxu0 0
    %183 = vmatpush1.bf16.msra.mxu0 0
    %184 = vmatprep.subr.bf16.mxu0 0
    %185 = vmatpush1.bf16.msra.mxu0 0
    %186 = vmatprep.subr.bf16.mxu0 0
    %187 = vmatpush1.bf16.msra.mxu0 0
    %188 = vmatprep.mubr.bf16.mxu0 0
    %189 = vmatmul.mubr.bf16.gmra.mrb[0].mxu0 %v74
    %v190 = vpop.f32.mrb[0].mxu0
    %v191 = vadd.f32 0.0, %v190
    %v192 = vpop.f32.mrb[0].mxu0
    %v193 = vadd.f32 0.0, %v192
    %v194 = vpop.f32.mrb[0].mxu0
    %v195 = vadd.f32 0.0, %v194
    %v196 = vpop.f32.mrb[0].mxu0
    %v197 = vadd.f32 0.0, %v196
    %198 = vdwg.mxu0
    %v199 = vld [vmem:[%s2] sm:$0x3]
    %v201 = vlaneseq
    %v202 = vshrl.u32 %v201, 7
    %v203 = vsub.s32 0, %v202
    %v204 = vrot.slane %v199, %v203
    %v205 = vlaneseq
    %v206 = vshrl.u32 %v205, 7
    %v207 = vsub.s32 1, %v206
    %v208 = vrot.slane %v199, %v207
    %v211 = vsub.f32 %v204, %v191
    %v212 = vsub.f32 %v208, %v193
    %v213 = vsub.f32 %v204, %v195
    %v214 = vsub.f32 %v208, %v197
    %v215 = vmin.f32 %v211, %v212
    %216 = vmin.xlane.f32.xlu0 %v215
    %v217 = vpop.xlane.xlu0 %216
    %v218 = vmin.f32 %v213, %v214
    %219 = vmin.xlane.f32.xlu0 %v218
    %v220 = vpop.xlane.xlu0 %219
    %v221 = vlaneseq
    %v222 = vand.u32 %v221, 127
    %v223 = vadd.s32 %v222, 128
    %vm224 = vcmp.eq.f32.partialorder %v211, %v217
    %vm225 = vcmp.eq.f32.partialorder %v212, %v217
    %vm226 = vcmp.eq.f32.partialorder %v213, %v220
    %vm227 = vcmp.eq.f32.partialorder %v214, %v220
    %v228 = vsel %vm224, %v222, 256
    %v229 = vsel %vm225, %v223, 256
    %v230 = vsel %vm226, %v222, 256
    %v231 = vsel %vm227, %v223, 256
    %vm232 = vcmp.lt.s32.totalorder %v228, %v229
    %v233 = vsel %vm232, %v228, %v229
    %v234 = vand.u32 %v233, 65535
    %v235 = vshra.s32 %v233, 16
    %v236 = vcvt.s32.f32 %v234
    %v237 = vcvt.s32.f32 %v235
    %238 = vmin.xlane.f32.xlu0 %v237
    %v239 = vpop.xlane.xlu0 %238
    %vm240 = vcmp.eq.f32.partialorder %v237, %v239
    %v241 = vsel %vm240, %v236, inf
    %242 = vmin.xlane.f32.xlu0 %v241
    %v243 = vpop.xlane.xlu0 %242
    %v244 = vcvt.f32.s32 %v243
    %v245 = vcvt.f32.s32 %v239
    %v246 = vshll.u32 %v245, 16
    %v247 = vadd.s32 %v246, %v244
    %vm248 = vcmp.lt.s32.totalorder %v230, %v231
    %v249 = vsel %vm248, %v230, %v231
    %v250 = vand.u32 %v249, 65535
    %v251 = vshra.s32 %v249, 16
    %v252 = vcvt.s32.f32 %v250
    %v253 = vcvt.s32.f32 %v251
    %254 = vmin.xlane.f32.xlu0 %v253
    %v255 = vpop.xlane.xlu0 %254
    %vm256 = vcmp.eq.f32.partialorder %v253, %v255
    %v257 = vsel %vm256, %v252, inf
    %258 = vmin.xlane.f32.xlu0 %v257
    %v259 = vpop.xlane.xlu0 %258
    %v260 = vcvt.f32.s32 %v259
    %v261 = vcvt.f32.s32 %v255
    %v262 = vshll.u32 %v261, 16
    %v263 = vadd.s32 %v262, %v260
    %s264 = smul.u32 0, 256
    %v265 = vstv %s264
    %v266 = vadd.s32 %v247, %v265
    %v267 = vadd.s32 %v263, %v265
    %v268 = vld [vmem:[#allocation2] sm:$0xff]
    %v269 = vld [vmem:[#allocation2 + $0x8] sm:$0xff]
    %vm270 = vcmp.lt.f32.partialorder %v217, %v268
    %vm271 = vcmp.lt.f32.partialorder %v220, %v269
    %v272 = vld [vmem:[#allocation3] sm:$0xff]
    %v273 = vld [vmem:[#allocation3 + $0x8] sm:$0xff]
    %v274 = vsel %vm270, %v266, %v272
    %v275 = vsel %vm271, %v267, %v273
    %vm276 = vcmask 7168
    %277 = vst.msk [vmem:[#allocation3] sm:$0xff] %vm276, %v274
    %278 = vst.msk [vmem:[#allocation3 + $0x8] sm:$0xff] %vm276, %v275
    %v279 = vld [vmem:[#allocation2] sm:$0xff]
    %v280 = vld [vmem:[#allocation2 + $0x8] sm:$0xff]
    %v281 = vsel %vm270, %v217, %v279
    %v282 = vsel %vm271, %v220, %v280
    %283 = vst.msk [vmem:[#allocation2] sm:$0xff] %vm276, %v281
    %284 = vst.msk [vmem:[#allocation2 + $0x8] sm:$0xff] %vm276, %v282
    // Predicated region
    $region26: #{tpu_custom_call.1} parent=1 // pred_check
      %p285 = pneg %p43
    $region27: #{tpu_custom_call.1} parent=1 // pred_check_branch
      %287 = sbr.rel (%p285) target = $region29
    $region28: #{tpu_custom_call.1} parent=1 // pred_region
      %v288 = vld [vmem:[#allocation3] sm:$0xff]
      %v289 = vld [vmem:[#allocation3 + $0x8] sm:$0xff]
      %290 = vst.msk [vmem:[%s3] sm:$0xff] %vm276, %v288
      %291 = vst.msk [vmem:[%s3 + $0x8] sm:$0xff] %vm276, %v289
    $region29: #{tpu_custom_call.1} parent=1 // pred_fallthru
      _
    // Predicated region
    $region30: #{tpu_custom_call.1} parent=1 // pred_check
      _
    $region31: #{tpu_custom_call.1} parent=1 // pred_check_branch
      %293 = sbr.rel (0) target = $region33
    $region32: #{tpu_custom_call.1} parent=1 // pred_region
      _
    $region33: #{tpu_custom_call.1} parent=1 // pred_fallthru
      _
    // Predicated region
    $region34: #{tpu_custom_call.1} parent=1 // pred_check
      _
    $region35: #{tpu_custom_call.1} parent=1 // pred_check_branch
      %295 = sbr.rel (0) target = $region37
    $region36: #{tpu_custom_call.1} parent=1 // pred_region
      _
    $region37: #{tpu_custom_call.1} parent=1 // pred_fallthru
      _
    %296 = vsyncpa [#allocation5], 1
    %297 = vsyncpa [#allocation7], 1

// kernel: tpu_custom_call.1
$region0: #{tpu_custom_call.1}
  #allocation0 [shape = 'u32[]', space=smem, size = 0x4, offset = 0x4, fixed_abs, tag = 'smem constant byte address 0x4 - core index']
  #allocation1 [shape = 'u32[144,128]{1,0:T(1,128)}', space=vmem, size = 0x12000, scoped, tag = 'internal scratch']
  #allocation2 [shape = 'f32[16,1]{1,0:T(8,128)}', space=vmem, size = 0x2000, scoped, tag = 'scratch operand']
  #allocation3 [shape = 's32[16,1]{1,0:T(8,128)}', space=vmem, size = 0x2000, scoped, tag = 'scratch operand']
  %s0 = inlined_call_operand.hbm [shape: bf16[16,128], index: 0, kind: input, shape index: {}]
  %s1 = inlined_call_operand.hbm [shape: bf16[128,256], index: 1, kind: input, shape index: {}]
  %s2 = inlined_call_operand.vmem [shape: f32[1,256], index: 2, kind: input, shape index: {}]
  %s3 = inlined_call_operand.vmem [shape: s32[16,1], index: 3, kind: output, shape index: {}]
  %s4 = sld [smem:[#allocation0]]
  $region38: #{tpu_custom_call.1} parent=0
    _
  %s6 = ssub.s32 1, %s4
  %s7 = scalar_select 0, %s6, %s4
  $region1: #{tpu_custom_call.1} parent=0
    #allocation4 [shape = 'u8[4096]{0}', space=vmem, size = 0x1000, scoped, tag = 'input window, operand 0, single buffered']
    #allocation5 [shape = 's32[1]{0}', space=sflag, size = 0x4, scoped, tag = 'scoped memory for tpu_custom_call.1']
    #allocation6 [shape = 'u8[65536]{0}', space=vmem, size = 0x10000, scoped, tag = 'input window, operand 1, single buffered']
    #allocation7 [shape = 's32[1]{0}', space=sflag, size = 0x4, scoped, tag = 'scoped memory for tpu_custom_call.1']
    %8 = vsyncpa [#allocation5], 0
    %9 = vsyncpa [#allocation7], 0
    // Predicated region
    $region2: #{tpu_custom_call.1} parent=1 // pred_check
      _
    $region3: #{tpu_custom_call.1} parent=1 // pred_check_branch
      %11 = sbr.rel (0) target = $region5
    $region4: #{tpu_custom_call.1} parent=1 // pred_region
      %s13 = ssub.s32 128, 128
      %14 = vsyncadd [#allocation5], %s13
      %s15 = sshll.u32 [#allocation4], 4
      %s16 = int_to_ptr.vmem [resolvable:$true] %s15
      %21 = dma.hbm_to_vmem [thread:$0]  %s0, 128, %s16, [#allocation5], 64, 64, 4
    $region5: #{tpu_custom_call.1} parent=1 // pred_fallthru
      _
    // Predicated region
    $region6: #{tpu_custom_call.1} parent=1 // pred_check
      _
    $region7: #{tpu_custom_call.1} parent=1 // pred_check_branch
      %23 = sbr.rel (0) target = $region9
    $region8: #{tpu_custom_call.1} parent=1 // pred_region
      %s25 = ssub.s32 2048, 2048
      %26 = vsyncadd [#allocation7], %s25
      %s27 = sshll.u32 [#allocation6], 4
      %s28 = int_to_ptr.vmem [resolvable:$true] %s27
      %33 = dma.hbm_to_vmem [thread:$0]  %s1, 2048, %s28, [#allocation7], 128, 128, 8
    $region9: #{tpu_custom_call.1} parent=1 // pred_fallthru
      _
    // Predicated region
    $region10: #{tpu_custom_call.1} parent=1 // pred_check
      _
    $region11: #{tpu_custom_call.1} parent=1 // pred_check_branch
      %35 = sbr.rel (0) target = $region13
    $region12: #{tpu_custom_call.1} parent=1 // pred_region
      _
    $region13: #{tpu_custom_call.1} parent=1 // pred_fallthru
      _
    // Predicated region
    $region14: #{tpu_custom_call.1} parent=1 // pred_check
      _
    $region15: #{tpu_custom_call.1} parent=1 // pred_check_branch
      %37 = sbr.rel (0) target = $region17
    $region16: #{tpu_custom_call.1} parent=1 // pred_region
      %38 = dma.done [#allocation5], 128
    $region17: #{tpu_custom_call.1} parent=1 // pred_fallthru
      _
    // Predicated region
    $region18: #{tpu_custom_call.1} parent=1 // pred_check
      _
    $region19: #{tpu_custom_call.1} parent=1 // pred_check_branch
      %40 = sbr.rel (0) target = $region21
    $region20: #{tpu_custom_call.1} parent=1 // pred_region
      %41 = dma.done [#allocation7], 2048
    $region21: #{tpu_custom_call.1} parent=1 // pred_fallthru
      _
    %p43 = scmp.eq.s32.totalorder 0, 0
    // Predicated region
    $region22: #{tpu_custom_call.1} parent=1 // pred_check
      %p44 = pneg %p43
    $region23: #{tpu_custom_call.1} parent=1 // pred_check_branch
      %46 = sbr.rel (%p44) target = $region25
    $region24: #{tpu_custom_call.1} parent=1 // pred_region
      %vm47 = vcmask 7168
      %48 = vst.msk [vmem:[#allocation2] sm:$0xff] %vm47, inf
      %49 = vst.msk [vmem:[#allocation2 + $0x8] sm:$0xff] %vm47, inf
      %50 = vst.msk [vmem:[#allocation3] sm:$0xff] %vm47, 0
      %51 = vst.msk [vmem:[#allocation3 + $0x8] sm:$0xff] %vm47, 0
    $region25: #{tpu_custom_call.1} parent=1 // pred_fallthru
      _
    %v52 = vld [vmem:[#allocation4] sm:$0xf]
    %v53 = vld [vmem:[#allocation4 + $0x4] sm:$0xf]
    %v54 = vld [vmem:[#allocation6] sm:$0xff]
    %v55 = vld [vmem:[#allocation6 + $0x8] sm:$0xff]
    %v56 = vld [vmem:[#allocation6 + $0x10] sm:$0xff]
    %v57 = vld [vmem:[#allocation6 + $0x18] sm:$0xff]
    %v58 = vld [vmem:[#allocation6 + $0x20] sm:$0xff]
    %v59 = vld [vmem:[#allocation6 + $0x28] sm:$0xff]
    %v60 = vld [vmem:[#allocation6 + $0x30] sm:$0xff]
    %v61 = vld [vmem:[#allocation6 + $0x38] sm:$0xff]
    %v62 = vld [vmem:[#allocation6 + $0x40] sm:$0xff]
    %v63 = vld [vmem:[#allocation6 + $0x48] sm:$0xff]
    %v64 = vld [vmem:[#allocation6 + $0x50] sm:$0xff]
    %v65 = vld [vmem:[#allocation6 + $0x58] sm:$0xff]
    %v66 = vld [vmem:[#allocation6 + $0x60] sm:$0xff]
    %v67 = vld [vmem:[#allocation6 + $0x68] sm:$0xff]
    %v68 = vld [vmem:[#allocation6 + $0x70] sm:$0xff]
    %v69 = vld [vmem:[#allocation6 + $0x78] sm:$0xff]
    %v72 = vunpack.c.l.b16 %v52
    %v73 = vunpack.c.l.b16 %v53
    %v74 = vpack.c.b16 %v73, %v72
    %v92 = vunpack.c.l.b16 %v54
    %v93 = vunpack.c.h.b16 %v54
    %v94 = vunpack.c.l.b16 %v55
    %v95 = vunpack.c.h.b16 %v55
    %v96 = vunpack.c.l.b16 %v56
    %v97 = vunpack.c.h.b16 %v56
    %v98 = vunpack.c.l.b16 %v57
    %v99 = vunpack.c.h.b16 %v57
    %v100 = vunpack.c.l.b16 %v58
    %v101 = vunpack.c.h.b16 %v58
    %v102 = vunpack.c.l.b16 %v59
    %v103 = vunpack.c.h.b16 %v59
    %v104 = vunpack.c.l.b16 %v60
    %v105 = vunpack.c.h.b16 %v60
    %v106 = vunpack.c.l.b16 %v61
    %v107 = vunpack.c.h.b16 %v61
    %v108 = vunpack.c.l.b16 %v62
    %v109 = vunpack.c.h.b16 %v62
    %v110 = vunpack.c.l.b16 %v63
    %v111 = vunpack.c.h.b16 %v63
    %v112 = vunpack.c.l.b16 %v64
    %v113 = vunpack.c.h.b16 %v64
    %v114 = vunpack.c.l.b16 %v65
    %v115 = vunpack.c.h.b16 %v65
    %v116 = vunpack.c.l.b16 %v66
    %v117 = vunpack.c.h.b16 %v66
    %v118 = vunpack.c.l.b16 %v67
    %v119 = vunpack.c.h.b16 %v67
    %v120 = vunpack.c.l.b16 %v68
    %v121 = vunpack.c.h.b16 %v68
    %v122 = vunpack.c.l.b16 %v69
    %v123 = vunpack.c.h.b16 %v69
    %v124 = vpack.c.b16 %v94, %v92
    %v125 = vpack.c.b16 %v95, %v93
    %v126 = vpack.c.b16 %v98, %v96
    %v127 = vpack.c.b16 %v99, %v97
    %v128 = vpack.c.b16 %v102, %v100
    %v129 = vpack.c.b16 %v103, %v101
    %v130 = vpack.c.b16 %v106, %v104
    %v131 = vpack.c.b16 %v107, %v105
    %v132 = vpack.c.b16 %v110, %v108
    %v133 = vpack.c.b16 %v111, %v109
    %v134 = vpack.c.b16 %v114, %v112
    %v135 = vpack.c.b16 %v115, %v113
    %v136 = vpack.c.b16 %v118, %v116
    %v137 = vpack.c.b16 %v119, %v117
    %v138 = vpack.c.b16 %v122, %v120
    %v139 = vpack.c.b16 %v123, %v121
    %156 = vmatprep.subr.bf16.mxu0 %v125
    %157 = vmatpush1.bf16.msra.mxu0 %v124
    %158 = vmatprep.subr.bf16.mxu0 %v127
    %159 = vmatpush1.bf16.msra.mxu0 %v126
    %160 = vmatprep.subr.bf16.mxu0 %v129
    %161 = vmatpush1.bf16.msra.mxu0 %v128
    %162 = vmatprep.subr.bf16.mxu0 %v131
    %163 = vmatpush1.bf16.msra.mxu0 %v130
    %164 = vmatprep.subr.bf16.mxu0 %v133
    %165 = vmatpush1.bf16.msra.mxu0 %v132
    %166 = vmatprep.subr.bf16.mxu0 %v135
    %167 = vmatpush1.bf16.msra.mxu0 %v134
    %168 = vmatprep.subr.bf16.mxu0 %v137
    %169 = vmatpush1.bf16.msra.mxu0 %v136
    %170 = vmatprep.subr.bf16.mxu0 %v139
    %171 = vmatpush1.bf16.msra.mxu0 %v138
    %172 = vmatprep.subr.bf16.mxu0 0
    %173 = vmatpush1.bf16.msra.mxu0 0
    %174 = vmatprep.subr.bf16.mxu0 0
    %175 = vmatpush1.bf16.msra.mxu0 0
    %176 = vmatprep.subr.bf16.mxu0 0
    %177 = vmatpush1.bf16.msra.mxu0 0
    %178 = vmatprep.subr.bf16.mxu0 0
    %179 = vmatpush1.bf16.msra.mxu0 0
    %180 = vmatprep.subr.bf16.mxu0 0
    %181 = vmatpush1.bf16.msra.mxu0 0
    %182 = vmatprep.subr.bf16.mxu0 0
    %183 = vmatpush1.bf16.msra.mxu0 0
    %184 = vmatprep.subr.bf16.mxu0 0
    %185 = vmatpush1.bf16.msra.mxu0 0
    %186 = vmatprep.subr.bf16.mxu0 0
    %187 = vmatpush1.bf16.msra.mxu0 0
    %188 = vmatprep.mubr.bf16.mxu0 0
    %189 = vmatmul.mubr.bf16.gmra.mrb[0].mxu0 %v74
    %v190 = vpop.f32.mrb[0].mxu0
    %v191 = vadd.f32 0.0, %v190
    %v192 = vpop.f32.mrb[0].mxu0
    %v193 = vadd.f32 0.0, %v192
    %v194 = vpop.f32.mrb[0].mxu0
    %v195 = vadd.f32 0.0, %v194
    %v196 = vpop.f32.mrb[0].mxu0
    %v197 = vadd.f32 0.0, %v196
    %198 = vdwg.mxu0
    %v199 = vld [vmem:[%s2] sm:$0x3]
    %v201 = vlaneseq
    %v202 = vshrl.u32 %v201, 7
    %v203 = vsub.s32 0, %v202
    %v204 = vrot.slane %v199, %v203
    %v205 = vlaneseq
    %v206 = vshrl.u32 %v205, 7
    %v207 = vsub.s32 1, %v206
    %v208 = vrot.slane %v199, %v207
    %v211 = vsub.f32 %v204, %v191
    %v212 = vsub.f32 %v208, %v193
    %v213 = vsub.f32 %v204, %v195
    %v214 = vsub.f32 %v208, %v197
    %v215 = vmin.f32 %v211, %v212
    %216 = vmin.xlane.f32.xlu0 %v215
    %v217 = vpop.xlane.xlu0 %216
    %v218 = vmin.f32 %v213, %v214
    %219 = vmin.xlane.f32.xlu0 %v218
    %v220 = vpop.xlane.xlu0 %219
    %v221 = vlaneseq
    %v222 = vand.u32 %v221, 127
    %v223 = vadd.s32 %v222, 128
    %vm224 = vcmp.eq.f32.partialorder %v211, %v217
    %vm225 = vcmp.eq.f32.partialorder %v212, %v217
    %vm226 = vcmp.eq.f32.partialorder %v213, %v220
    %vm227 = vcmp.eq.f32.partialorder %v214, %v220
    %v228 = vsel %vm224, %v222, 256
    %v229 = vsel %vm225, %v223, 256
    %v230 = vsel %vm226, %v222, 256
    %v231 = vsel %vm227, %v223, 256
    %vm232 = vcmp.lt.s32.totalorder %v228, %v229
    %v233 = vsel %vm232, %v228, %v229
    %v234 = vand.u32 %v233, 65535
    %v235 = vshra.s32 %v233, 16
    %v236 = vcvt.s32.f32 %v234
    %v237 = vcvt.s32.f32 %v235
    %238 = vmin.xlane.f32.xlu0 %v237
    %v239 = vpop.xlane.xlu0 %238
    %vm240 = vcmp.eq.f32.partialorder %v237, %v239
    %v241 = vsel %vm240, %v236, inf
    %242 = vmin.xlane.f32.xlu0 %v241
    %v243 = vpop.xlane.xlu0 %242
    %v244 = vcvt.f32.s32 %v243
    %v245 = vcvt.f32.s32 %v239
    %v246 = vshll.u32 %v245, 16
    %v247 = vadd.s32 %v246, %v244
    %vm248 = vcmp.lt.s32.totalorder %v230, %v231
    %v249 = vsel %vm248, %v230, %v231
    %v250 = vand.u32 %v249, 65535
    %v251 = vshra.s32 %v249, 16
    %v252 = vcvt.s32.f32 %v250
    %v253 = vcvt.s32.f32 %v251
    %254 = vmin.xlane.f32.xlu0 %v253
    %v255 = vpop.xlane.xlu0 %254
    %vm256 = vcmp.eq.f32.partialorder %v253, %v255
    %v257 = vsel %vm256, %v252, inf
    %258 = vmin.xlane.f32.xlu0 %v257
    %v259 = vpop.xlane.xlu0 %258
    %v260 = vcvt.f32.s32 %v259
    %v261 = vcvt.f32.s32 %v255
    %v262 = vshll.u32 %v261, 16
    %v263 = vadd.s32 %v262, %v260
    %s264 = smul.u32 0, 256
    %v265 = vstv %s264
    %v266 = vadd.s32 %v247, %v265
    %v267 = vadd.s32 %v263, %v265
    %v268 = vld [vmem:[#allocation2] sm:$0xff]
    %v269 = vld [vmem:[#allocation2 + $0x8] sm:$0xff]
    %vm270 = vcmp.lt.f32.partialorder %v217, %v268
    %vm271 = vcmp.lt.f32.partialorder %v220, %v269
    %v272 = vld [vmem:[#allocation3] sm:$0xff]
    %v273 = vld [vmem:[#allocation3 + $0x8] sm:$0xff]
    %v274 = vsel %vm270, %v266, %v272
    %v275 = vsel %vm271, %v267, %v273
    %vm276 = vcmask 7168
    %277 = vst.msk [vmem:[#allocation3] sm:$0xff] %vm276, %v274
    %278 = vst.msk [vmem:[#allocation3 + $0x8] sm:$0xff] %vm276, %v275
    %v279 = vld [vmem:[#allocation2] sm:$0xff]
    %v280 = vld [vmem:[#allocation2 + $0x8] sm:$0xff]
    %v281 = vsel %vm270, %v217, %v279
    %v282 = vsel %vm271, %v220, %v280
    %283 = vst.msk [vmem:[#allocation2] sm:$0xff] %vm276, %v281
    %284 = vst.msk [vmem:[#allocation2 + $0x8] sm:$0xff] %vm276, %v282
    // Predicated region
    $region26: #{tpu_custom_call.1} parent=1 // pred_check
      %p285 = pneg %p43
    $region27: #{tpu_custom_call.1} parent=1 // pred_check_branch
      %287 = sbr.rel (%p285) target = $region29
    $region28: #{tpu_custom_call.1} parent=1 // pred_region
      %v288 = vld [vmem:[#allocation3] sm:$0xff]
      %v289 = vld [vmem:[#allocation3 + $0x8] sm:$0xff]
      %290 = vst.msk [vmem:[%s3] sm:$0xff] %vm276, %v288
      %291 = vst.msk [vmem:[%s3 + $0x8] sm:$0xff] %vm276, %v289
    $region29: #{tpu_custom_call.1} parent=1 // pred_fallthru
      _
    // Predicated region
    $region30: #{tpu_custom_call.1} parent=1 // pred_check
      _
    $region31: #{tpu_custom_call.1} parent=1 // pred_check_branch
      %293 = sbr.rel (0) target = $region33
    $region32: #{tpu_custom_call.1} parent=1 // pred_region
      _
    $region33: #{tpu_custom_call.1} parent=1 // pred_fallthru
      _
    // Predicated region
    $region34: #{tpu_custom_call.1} parent=1 // pred_check
      _
    $region35: #{tpu_custom_call.1} parent=1 // pred_check_branch
      %295 = sbr.rel (0) target = $region37
    $region36: #{tpu_custom_call.1} parent=1 // pred_region
      _
    $region37: #{tpu_custom_call.1} parent=1 // pred_fallthru
      _
    %296 = vsyncpa [#allocation5], 1
    %297 = vsyncpa [#allocation7], 1

</llo_original>
